<compile_context>
chip_gen: v7x
topology: tpu7x:2x2x1
jax: 0.10.0
libtpu: 0.0.40
codegen_flags: <defaults>
</compile_context>

<pallas_src>
import jax
import jax.numpy as jnp
from jax.experimental import pallas as pl
from jax.experimental.pallas import tpu as pltpu


_LANE = 128
_TARGET_BLOCK_BYTES = 4 * 1024 * 1024   # ~4 MiB blocks: mem-bound sweet spot
_VMEM_LIMIT_BYTES = 32 * 1024 * 1024    # safe on v5e/v6e (128 MiB) and v7x (64 MiB)


def _round_up(x: int, m: int) -> int:
    return ((x + m - 1) // m) * m


def _slice_copy_kernel(x_ref, o_ref):
    # Full-width block: keep only the first L_out lanes (the chomp trim).
    o_ref[...] = x_ref[:, : o_ref.shape[-1]]


def _copy_kernel(x_ref, o_ref):
    # Column-tiled block: BlockSpec already restricted the view to the kept
    # region, so the body is a pure identity copy.
    o_ref[...] = x_ref[...]


def chomp1d(x: jax.Array, chomp_size: int,
            block_bytes: int = _TARGET_BLOCK_BYTES) -> jax.Array:
    """Pallas equivalent of Chomp1d.forward: x[:, :, :-chomp_size].

    Note: chomp_size == 0 is rejected (PyTorch's x[:, :, :-0] would return an
    empty tensor, which is never what a TCN wants).
    """
    assert chomp_size > 0, "chomp_size must be positive (matches x[:, :, :-k])"
    n, c, l = x.shape
    l_out = l - chomp_size
    assert l_out > 0, "chomp_size must be smaller than the sequence length"

    rows = n * c
    x2 = x.reshape(rows, l)  # free reshape: batch/channels -> sublanes

    itemsize = jnp.dtype(x.dtype).itemsize
    sub_mult = max(8, 32 // itemsize)          # sublane packing: 8 f32 / 16 bf16 / 32 int8
    budget_elems = max(1, block_bytes // itemsize)

    l_in_pad = _round_up(l, _LANE)
    l_out_pad = _round_up(l_out, _LANE)

    if l_in_pad * sub_mult <= budget_elems:
        # ---- Main path: one full-width column slab per row block. ----------
        br = min(rows, max(sub_mult,
                           (budget_elems // l_in_pad) // sub_mult * sub_mult))
        n_row = pl.cdiv(rows, br)
        # v7x megacore: make sure both TensorCores get row blocks.
        if n_row < 2 and rows > sub_mult:
            br = _round_up(pl.cdiv(rows, 2), sub_mult)
            n_row = pl.cdiv(rows, br)

        cost = pl.CostEstimate(
            flops=0, transcendentals=0,
            bytes_accessed=rows * l * itemsize + rows * l_out * itemsize)

        out2 = pl.pallas_call(
            _slice_copy_kernel,
            out_shape=jax.ShapeDtypeStruct((rows, l_out), x.dtype),
            grid=(n_row,),
            in_specs=[pl.BlockSpec((br, l), lambda i: (i, 0))],
            out_specs=pl.BlockSpec((br, l_out), lambda i: (i, 0)),
            compiler_params=pltpu.CompilerParams(
                dimension_semantics=("parallel",),
                vmem_limit_bytes=_VMEM_LIMIT_BYTES),
            cost_estimate=cost,
        )(x2)
    else:
        # ---- Very long sequences: balanced lane-dense column tiling. -------
        bc_max = max(_LANE, ((budget_elems // sub_mult) // _LANE) * _LANE)
        n_col = pl.cdiv(l_out_pad, bc_max)                 # >= 2 here
        bc = _round_up(pl.cdiv(l_out_pad, n_col), _LANE)   # balanced, x128
        n_col = pl.cdiv(l_out, bc)

        br = min(rows, max(sub_mult,
                           (budget_elems // bc) // sub_mult * sub_mult))
        n_row = pl.cdiv(rows, br)

        read_cols = min(l, n_col * bc)
        cost = pl.CostEstimate(
            flops=0, transcendentals=0,
            bytes_accessed=rows * read_cols * itemsize + rows * l_out * itemsize)

        out2 = pl.pallas_call(
            _copy_kernel,
            out_shape=jax.ShapeDtypeStruct((rows, l_out), x.dtype),
            grid=(n_row, n_col),
            in_specs=[pl.BlockSpec((br, bc), lambda i, j: (i, j))],
            out_specs=pl.BlockSpec((br, bc), lambda i, j: (i, j)),
            compiler_params=pltpu.CompilerParams(
                dimension_semantics=("parallel", "parallel"),
                vmem_limit_bytes=_VMEM_LIMIT_BYTES),
            cost_estimate=cost,
        )(x2)

    return out2.reshape(n, c, l_out)


if __name__ == "__main__":
    key = jax.random.PRNGKey(0)
    k1, k2, k3 = jax.random.split(key, 3)

    # Test 1: tiny sequence (the spec's suggested small shape) -> slab path.
    N, C, L, chomp = 2, 4, 16, 3
    x_small = jax.random.normal(k1, (N, C, L), dtype=jnp.float32)
    y_small = chomp1d(x_small, chomp)
    jax.block_until_ready(y_small)
    ref_small = x_small[:, :, :-chomp]
    assert y_small.shape == (N, C, L - chomp)
    assert jnp.array_equal(y_small, ref_small)

    # Test 2: bf16, more rows -> slab path with the v7x row split (>=2 blocks)
    # and dtype-aware sublane packing.
    N2, C2, L2, chomp2 = 2, 16, 512, 4
    x_mid = jax.random.normal(k2, (N2, C2, L2), dtype=jnp.bfloat16)
    y_mid = chomp1d(x_mid, chomp2)
    jax.block_until_ready(y_mid)
    ref_mid = x_mid[:, :, :-chomp2]
    assert y_mid.shape == (N2, C2, L2 - chomp2)
    assert jnp.array_equal(y_mid, ref_mid)

    # Test 3: force the long-sequence column-tiled path with a small block
    # budget (balanced 128-multiple column blocks, masked tail in last block).
    N3, C3, L3, chomp3 = 2, 4, 1200, 7
    x_big = jax.random.normal(k3, (N3, C3, L3), dtype=jnp.float32)
    y_big = chomp1d(x_big, chomp3, block_bytes=32 * 1024)
    jax.block_until_ready(y_big)
    ref_big = x_big[:, :, :-chomp3]
    assert y_big.shape == (N3, C3, L3 - chomp3)
    assert jnp.array_equal(y_big, ref_big)

    print("KERNEL_OK")
</pallas_src>

<mosaic_0001>
module attributes {stable_mosaic.version = 11 : i64} {
  func.func @_slice_copy_kernel(%arg0: i32, %arg1: memref<8x16xf32, #tpu.memory_space<vmem>>, %arg2: memref<8x13xf32, #tpu.memory_space<vmem>>) attributes {dimension_semantics = [#tpu.dimension_semantics<parallel>], iteration_bounds = array<i64: 1>, scalar_prefetch = 0 : i64, scratch_operands = 0 : i64, tpu.core_type = #tpu.core_type<tc>, window_params = [{transform_indices = @transform_0, window_bounds = array<i64: 8, 16>}, {transform_indices = @transform_1, window_bounds = array<i64: 8, 13>}]} {
    %c0 = arith.constant 0 : index
    %c0_0 = arith.constant 0 : index
    %0 = vector.load %arg1[%c0, %c0_0] : memref<8x16xf32, #tpu.memory_space<vmem>>, vector<8x13xf32>
    %c0_1 = arith.constant 0 : index
    %c0_2 = arith.constant 0 : index
    %1 = vector.load %arg2[%c0_1, %c0_2] : memref<8x13xf32, #tpu.memory_space<vmem>>, vector<8x13xf32>
    tpu.vector_store %arg2[%c0_1, %c0_2], %0 {strides = array<i32>} : memref<8x13xf32, #tpu.memory_space<vmem>>, vector<8x13xf32>,
    return
  }
  func.func @transform_0(%arg0: i32) -> (i32, i32) {
    %c0_i32 = arith.constant 0 : i32
    %c0_i32_0 = arith.constant 0 : i32
    return %arg0, %c0_i32 : i32, i32
  }
  func.func @transform_1(%arg0: i32) -> (i32, i32) {
    %c0_i32 = arith.constant 0 : i32
    %c0_i32_0 = arith.constant 0 : i32
    return %arg0, %c0_i32 : i32, i32
  }
}

</mosaic_0001>

<llo_original>
// kernel: tpu_custom_call.1
$region0: #{tpu_custom_call.1}
  #allocation0 [shape = 'u32[]', space=smem, size = 0x4, offset = 0x4, fixed_abs, tag = 'smem constant byte address 0x4 - core index']
  #allocation1 [shape = 'u32[144,128]{1,0:T(1,128)}', space=vmem, size = 0x12000, scoped, tag = 'internal scratch']
  %s0 = inlined_call_operand.hbm [shape: f32[8,16], index: 0, kind: input, shape index: {}]
  %s1 = inlined_call_operand.hbm [shape: f32[8,13], index: 1, kind: output, shape index: {}]
  %s2 = sld [smem:[#allocation0]]
  $region18: #{tpu_custom_call.1} parent=0
    _
  %s4 = ssub.s32 1, %s2
  %s5 = scalar_select 0, %s4, %s2
  $region1: #{tpu_custom_call.1} parent=0
    #allocation2 [shape = 'u8[4096]{0}', space=vmem, size = 0x1000, scoped, tag = 'input window, operand 0, single buffered']
    #allocation3 [shape = 's32[1]{0}', space=sflag, size = 0x4, scoped, tag = 'scoped memory for tpu_custom_call.1']
    #allocation4 [shape = 's32[1]{0}', space=sflag, size = 0x4, scoped, tag = 'scoped memory for tpu_custom_call.1']
    #allocation5 [shape = 'u8[4096]{0}', space=vmem, size = 0x1000, scoped, tag = 'output window, operand 0, single buffered']
    %6 = vsyncpa [#allocation3], 0
    %7 = vsyncpa [#allocation4], 0
    // Predicated region
    $region2: #{tpu_custom_call.1} parent=1 // pred_check
      _
    $region3: #{tpu_custom_call.1} parent=1 // pred_check_branch
      %9 = sbr.rel (0) target = $region5
    $region4: #{tpu_custom_call.1} parent=1 // pred_region
      %s11 = ssub.s32 128, 128
      %12 = vsyncadd [#allocation3], %s11
      %s14 = sshll.u32 [#allocation2], 4
      %s15 = int_to_ptr.vmem [resolvable:$true] %s14
      %17 = dma.hbm_to_vmem [thread:$0]  %s0, 128, %s15, [#allocation3]
    $region5: #{tpu_custom_call.1} parent=1 // pred_fallthru
      _
    // Predicated region
    $region6: #{tpu_custom_call.1} parent=1 // pred_check
      _
    $region7: #{tpu_custom_call.1} parent=1 // pred_check_branch
      %19 = sbr.rel (0) target = $region9
    $region8: #{tpu_custom_call.1} parent=1 // pred_region
      %20 = dma.done [#allocation3], 128
    $region9: #{tpu_custom_call.1} parent=1 // pred_fallthru
      _
    %v21 = vld [vmem:[#allocation2] sm:$0xff]
    %vm22 = vcmask 105472
    %23 = vst.msk [vmem:[#allocation5] sm:$0xff] %vm22, %v21
    // Predicated region
    $region10: #{tpu_custom_call.1} parent=1 // pred_check
      _
    $region11: #{tpu_custom_call.1} parent=1 // pred_check_branch
      %25 = sbr.rel (0) target = $region13
    $region12: #{tpu_custom_call.1} parent=1 // pred_region
      %s27 = ssub.s32 128, 128
      %28 = vsyncadd [#allocation4], %s27
      %s30 = sshll.u32 [#allocation5], 4
      %s31 = int_to_ptr.vmem [resolvable:$true] %s30
      %33 = dma.vmem_to_hbm [thread:$0]  %s31, 128, %s1, [#allocation4]
    $region13: #{tpu_custom_call.1} parent=1 // pred_fallthru
      _
    // Predicated region
    $region14: #{tpu_custom_call.1} parent=1 // pred_check
      _
    $region15: #{tpu_custom_call.1} parent=1 // pred_check_branch
      %35 = sbr.rel (0) target = $region17
    $region16: #{tpu_custom_call.1} parent=1 // pred_region
      %36 = dma.done [#allocation4], 128
    $region17: #{tpu_custom_call.1} parent=1 // pred_fallthru
      _
    %37 = vsyncpa [#allocation3], 1
    %38 = vsyncpa [#allocation4], 1

</llo_original>
